<compile_context>
chip_gen: v5e
topology: v5e:2x2
jax: 0.10.0
libtpu: 0.0.40
codegen_flags: <defaults>
</compile_context>

<pallas_src>
from math import floor

import jax
import jax.numpy as jnp
import numpy as np
from jax.experimental import pallas as pl
from jax.experimental.pallas import tpu as pltpu


# ----------------------------------------------------------------------------
# Fused Pallas kernel: conv1 + ReLU -> conv2 + ReLU -> dense (1x1 conv)
# ----------------------------------------------------------------------------
def _fused_tcn_kernel(x_ref, w1_ref, b1_ref, w2_ref, b2_ref, wo_ref, bo_ref, o_ref):
    """All arrays live fully in VMEM; three back-to-back MXU matmuls.

    x_ref : (B, C_in*L_in)          flattened input (channel-major, NCL order)
    w1_ref: (C_in*L_in, C1*L1)      dense-lowered, pre-transposed conv1 weight
    b1_ref: (1, C1*L1)              conv1 bias repeated over positions
    w2_ref: (C1*L1, C2*L2)          dense-lowered, pre-transposed conv2 weight
    b2_ref: (1, C2*L2)
    wo_ref: (C2*L2, O)              pre-transposed 1x1-conv (dense) weight
    bo_ref: (1, O)
    o_ref : (B, O)
    """
    x = x_ref[...]

    h1 = jnp.dot(x, w1_ref[...], preferred_element_type=jnp.float32) + b1_ref[...]
    h1 = jnp.maximum(h1, 0.0)
    # dropout: identity (eval mode)

    h2 = jnp.dot(h1, w2_ref[...], preferred_element_type=jnp.float32) + b2_ref[...]
    h2 = jnp.maximum(h2, 0.0)
    # dropout: identity (eval mode)

    out = jnp.dot(h2, wo_ref[...], preferred_element_type=jnp.float32) + bo_ref[...]
    o_ref[...] = out.astype(o_ref.dtype)


# ----------------------------------------------------------------------------
# Host-side parameter preparation (done once, outside the kernel)
# ----------------------------------------------------------------------------
def _conv_weight_to_dense(w, l_in, stride):
    """Lower a strided Conv1d weight (C_out, C_in, K) to a dense matrix
    (C_out*L_out, C_in*L_in) such that   y_flat = dense @ x_flat   reproduces
    the convolution (channel-major flattening on both sides)."""
    c_out, c_in, k = w.shape
    l_out = (l_in - k) // stride + 1
    mat = jnp.zeros((c_out, l_out, c_in, l_in), w.dtype)
    for l in range(l_out):  # tiny static loop, trace-time only
        mat = mat.at[:, l, :, l * stride:l * stride + k].set(w)
    return mat.reshape(c_out * l_out, c_in * l_in), l_out


def prepare_params(params, meta):
    """Convert raw (PyTorch-layout) parameters into the fused-kernel layout."""
    stride = meta["stride"]
    l_in = meta["len_segment"]

    w1d, l1 = _conv_weight_to_dense(params["w1"], l_in, stride)
    w2d, l2 = _conv_weight_to_dense(params["w2"], l1, stride)

    prepared = {
        "w1_t": jnp.asarray(w1d.T),                              # (C_in*L_in, C1*L1)
        "b1_row": jnp.repeat(params["b1"], l1)[None, :],         # (1, C1*L1)
        "w2_t": jnp.asarray(w2d.T),                              # (C1*L1, C2*L2)
        "b2_row": jnp.repeat(params["b2"], l2)[None, :],         # (1, C2*L2)
        "wo_t": jnp.asarray(params["w_out"].T),                  # (F, O)
        "bo_row": params["b_out"][None, :],                      # (1, O)
    }
    return prepared


# ----------------------------------------------------------------------------
# Forward wrapper
# ----------------------------------------------------------------------------
def feature_extractor_tcn_forward(prepared, f):
    """f: (B, num_f_maps, len_segment) -> (B, output_dim). (B > 1 assumed for
    the trailing .squeeze() of the PyTorch module.)"""
    B = f.shape[0]
    x_flat = f.reshape(B, -1)  # channel-major flatten, matches NCL conv indexing
    out_dim = prepared["bo_row"].shape[1]

    return pl.pallas_call(
        _fused_tcn_kernel,
        out_shape=jax.ShapeDtypeStruct((B, out_dim), f.dtype),
        in_specs=[pl.BlockSpec(memory_space=pltpu.MemorySpace.VMEM)] * 7,
        out_specs=pl.BlockSpec(memory_space=pltpu.MemorySpace.VMEM),
    )(
        x_flat,
        prepared["w1_t"], prepared["b1_row"],
        prepared["w2_t"], prepared["b2_row"],
        prepared["wo_t"], prepared["bo_row"],
    )


# ----------------------------------------------------------------------------
# Parameter construction (mirrors the PyTorch module's shapes)
# ----------------------------------------------------------------------------
def init_params(key, num_f_maps, output_dim, len_segment, kernel_1, kernel_2,
                stride, decrease_f_maps=False):
    num_f_maps = int(num_f_maps)
    output_dim = int(output_dim)
    if decrease_f_maps:
        f_maps_2 = max(num_f_maps // 2, 1)
        f_maps_3 = max(num_f_maps // 4, 1)
    else:
        f_maps_2 = f_maps_3 = num_f_maps
    length = int(floor((len_segment - kernel_1) / stride + 1))
    length = floor((length - kernel_2) / stride + 1)
    features = length * f_maps_3

    ks = jax.random.split(key, 6)

    def uniform_init(k, shape, fan_in):
        bound = 1.0 / jnp.sqrt(float(fan_in))
        return jax.random.uniform(k, shape, jnp.float32, -bound, bound)

    params = {
        "w1": uniform_init(ks[0], (f_maps_2, num_f_maps, kernel_1), num_f_maps * kernel_1),
        "b1": uniform_init(ks[1], (f_maps_2,), num_f_maps * kernel_1),
        "w2": uniform_init(ks[2], (f_maps_3, f_maps_2, kernel_2), f_maps_2 * kernel_2),
        "b2": uniform_init(ks[3], (f_maps_3,), f_maps_2 * kernel_2),
        "w_out": uniform_init(ks[4], (output_dim, features), features),
        "b_out": uniform_init(ks[5], (output_dim,), features),
    }
    meta = {"stride": stride, "len_segment": len_segment, "features": features}
    return params, meta


# ----------------------------------------------------------------------------
# Pure-JAX reference (for a correctness sanity check)
# ----------------------------------------------------------------------------
def reference_forward(params, meta, f):
    stride = meta["stride"]

    def conv1d_relu(x, w, b):
        y = jax.lax.conv_general_dilated(
            x, w, window_strides=(stride,), padding="VALID",
            dimension_numbers=("NCH", "OIH", "NCH"))
        return jax.nn.relu(y + b[None, :, None])

    h = conv1d_relu(f, params["w1"], params["b1"])
    h = conv1d_relu(h, params["w2"], params["b2"])
    h_flat = h.reshape(h.shape[0], -1)
    return h_flat @ params["w_out"].T + params["b_out"][None, :]


# ----------------------------------------------------------------------------
# Main
# ----------------------------------------------------------------------------
if __name__ == "__main__":
    # Small, module-consistent shapes.
    B = 2
    num_f_maps = 8
    output_dim = 16
    len_segment = 16
    kernel_1 = 5
    kernel_2 = 3
    stride = 2

    key = jax.random.PRNGKey(0)
    k_param, k_x = jax.random.split(key)
    params, meta = init_params(
        k_param, num_f_maps, output_dim, len_segment, kernel_1, kernel_2, stride
    )
    prepared = prepare_params(params, meta)

    x = jax.random.normal(k_x, (B, num_f_maps, len_segment), jnp.float32)

    out = feature_extractor_tcn_forward(prepared, x)
    out = jax.block_until_ready(out)
    assert out.shape == (B, output_dim), out.shape

    ref = jax.block_until_ready(reference_forward(params, meta, x))
    np.testing.assert_allclose(np.asarray(out), np.asarray(ref), rtol=5e-3, atol=5e-3)

    print("KERNEL_OK")
</pallas_src>

<mosaic_0001>
module attributes {stable_mosaic.version = 11 : i64} {
  func.func @_fused_tcn_kernel(%arg0: memref<2x128xf32, #tpu.memory_space<vmem>>, %arg1: memref<128x48xf32, #tpu.memory_space<vmem>>, %arg2: memref<1x48xf32, #tpu.memory_space<vmem>>, %arg3: memref<48x16xf32, #tpu.memory_space<vmem>>, %arg4: memref<1x16xf32, #tpu.memory_space<vmem>>, %arg5: memref<16x16xf32, #tpu.memory_space<vmem>>, %arg6: memref<1x16xf32, #tpu.memory_space<vmem>>, %arg7: memref<2x16xf32, #tpu.memory_space<vmem>>) attributes {dimension_semantics = [], scalar_prefetch = 0 : i64, scratch_operands = 0 : i64, tpu.core_type = #tpu.core_type<tc>} {
    %c0 = arith.constant 0 : index
    %c0_0 = arith.constant 0 : index
    %0 = vector.load %arg0[%c0, %c0_0] : memref<2x128xf32, #tpu.memory_space<vmem>>, vector<2x128xf32>
    %c0_1 = arith.constant 0 : index
    %c0_2 = arith.constant 0 : index
    %1 = vector.load %arg1[%c0_1, %c0_2] : memref<128x48xf32, #tpu.memory_space<vmem>>, vector<128x48xf32>
    %cst = arith.constant dense<0.000000e+00> : vector<2x48xf32>
    %2 = tpu.matmul %0, %1, %cst {dimension_numbers = #tpu.dot_dimension_numbers<[1], [0], [0], [1], [0, 0, 1, 1], [], []>} : vector<2x128xf32>, vector<128x48xf32>, vector<2x48xf32> -> vector<2x48xf32>
    %c0_3 = arith.constant 0 : index
    %c0_4 = arith.constant 0 : index
    %3 = vector.load %arg2[%c0_3, %c0_4] : memref<1x48xf32, #tpu.memory_space<vmem>>, vector<1x48xf32>
    %4 = vector.broadcast %3 : vector<1x48xf32> to vector<2x48xf32>
    %5 = arith.addf %2, %4 : vector<2x48xf32>
    %cst_5 = arith.constant 0.000000e+00 : f32
    %6 = vector.broadcast %cst_5 : f32 to vector<2x48xf32>
    %7 = arith.maximumf %5, %6 : vector<2x48xf32>
    %c0_6 = arith.constant 0 : index
    %c0_7 = arith.constant 0 : index
    %8 = vector.load %arg3[%c0_6, %c0_7] : memref<48x16xf32, #tpu.memory_space<vmem>>, vector<48x16xf32>
    %cst_8 = arith.constant dense<0.000000e+00> : vector<2x16xf32>
    %9 = tpu.matmul %7, %8, %cst_8 {dimension_numbers = #tpu.dot_dimension_numbers<[1], [0], [0], [1], [0, 0, 1, 1], [], []>} : vector<2x48xf32>, vector<48x16xf32>, vector<2x16xf32> -> vector<2x16xf32>
    %c0_9 = arith.constant 0 : index
    %c0_10 = arith.constant 0 : index
    %10 = vector.load %arg4[%c0_9, %c0_10] : memref<1x16xf32, #tpu.memory_space<vmem>>, vector<1x16xf32>
    %11 = vector.broadcast %10 : vector<1x16xf32> to vector<2x16xf32>
    %12 = arith.addf %9, %11 : vector<2x16xf32>
    %cst_11 = arith.constant 0.000000e+00 : f32
    %13 = vector.broadcast %cst_11 : f32 to vector<2x16xf32>
    %14 = arith.maximumf %12, %13 : vector<2x16xf32>
    %c0_12 = arith.constant 0 : index
    %c0_13 = arith.constant 0 : index
    %15 = vector.load %arg5[%c0_12, %c0_13] : memref<16x16xf32, #tpu.memory_space<vmem>>, vector<16x16xf32>
    %cst_14 = arith.constant dense<0.000000e+00> : vector<2x16xf32>
    %16 = tpu.matmul %14, %15, %cst_14 {dimension_numbers = #tpu.dot_dimension_numbers<[1], [0], [0], [1], [0, 0, 1, 1], [], []>} : vector<2x16xf32>, vector<16x16xf32>, vector<2x16xf32> -> vector<2x16xf32>
    %c0_15 = arith.constant 0 : index
    %c0_16 = arith.constant 0 : index
    %17 = vector.load %arg6[%c0_15, %c0_16] : memref<1x16xf32, #tpu.memory_space<vmem>>, vector<1x16xf32>
    %18 = vector.broadcast %17 : vector<1x16xf32> to vector<2x16xf32>
    %19 = arith.addf %16, %18 : vector<2x16xf32>
    %c0_17 = arith.constant 0 : index
    %c0_18 = arith.constant 0 : index
    %20 = vector.load %arg7[%c0_17, %c0_18] : memref<2x16xf32, #tpu.memory_space<vmem>>, vector<2x16xf32>
    tpu.vector_store %arg7[%c0_17, %c0_18], %19 {strides = array<i32>} : memref<2x16xf32, #tpu.memory_space<vmem>>, vector<2x16xf32>,
    return
  }
}

</mosaic_0001>

<llo_original>
// kernel: tpu_custom_call.1
$region0: #{tpu_custom_call.1}
  #allocation0 [shape = 'u32[]', space=smem, size = 0x4, offset = 0x4, fixed_abs, tag = 'smem constant byte address 0x4 - core index']
  #allocation1 [shape = 'u32[72,128]{1,0:T(1,128)}', space=vmem, size = 0x9000, scoped, tag = 'internal scratch']
  %s0 = inlined_call_operand.vmem [shape: f32[2,128], index: 0, kind: input, shape index: {}]
  %s1 = inlined_call_operand.vmem [shape: f32[128,48], index: 1, kind: input, shape index: {}]
  %s2 = inlined_call_operand.vmem [shape: f32[1,48], index: 2, kind: input, shape index: {}]
  %s3 = inlined_call_operand.vmem [shape: f32[48,16], index: 3, kind: input, shape index: {}]
  %s4 = inlined_call_operand.vmem [shape: f32[1,16], index: 4, kind: input, shape index: {}]
  %s5 = inlined_call_operand.vmem [shape: f32[16,16], index: 5, kind: input, shape index: {}]
  %s6 = inlined_call_operand.vmem [shape: f32[1,16], index: 6, kind: input, shape index: {}]
  %s7 = inlined_call_operand.hbm [shape: f32[2,16], index: 7, kind: output, shape index: {}]
  %s8 = sld [smem:[#allocation0]]
  $region38: #{tpu_custom_call.1} parent=0
    _
  %s10 = ssub.s32 1, %s8
  %s11 = scalar_select 0, %s10, %s8
  $region1: #{tpu_custom_call.1} parent=0
    #allocation2 [shape = 'u8[1024]{0}', space=vmem, size = 0x400, scoped, tag = 'output window, operand 0, single buffered']
    #allocation3 [shape = 's32[1]{0}', space=sflag, size = 0x4, scoped, tag = 'scoped memory for tpu_custom_call.1']
    %12 = vsyncpa [#allocation3], 0
    // Predicated region
    $region2: #{tpu_custom_call.1} parent=1 // pred_check
      _
    $region3: #{tpu_custom_call.1} parent=1 // pred_check_branch
      %14 = sbr.rel (0) target = $region5
    $region4: #{tpu_custom_call.1} parent=1 // pred_region
      _
    $region5: #{tpu_custom_call.1} parent=1 // pred_fallthru
      _
    // Predicated region
    $region6: #{tpu_custom_call.1} parent=1 // pred_check
      _
    $region7: #{tpu_custom_call.1} parent=1 // pred_check_branch
      %16 = sbr.rel (0) target = $region9
    $region8: #{tpu_custom_call.1} parent=1 // pred_region
      _
    $region9: #{tpu_custom_call.1} parent=1 // pred_fallthru
      _
    // Predicated region
    $region10: #{tpu_custom_call.1} parent=1 // pred_check
      _
    $region11: #{tpu_custom_call.1} parent=1 // pred_check_branch
      %18 = sbr.rel (0) target = $region13
    $region12: #{tpu_custom_call.1} parent=1 // pred_region
      _
    $region13: #{tpu_custom_call.1} parent=1 // pred_fallthru
      _
    // Predicated region
    $region14: #{tpu_custom_call.1} parent=1 // pred_check
      _
    $region15: #{tpu_custom_call.1} parent=1 // pred_check_branch
      %20 = sbr.rel (0) target = $region17
    $region16: #{tpu_custom_call.1} parent=1 // pred_region
      _
    $region17: #{tpu_custom_call.1} parent=1 // pred_fallthru
      _
    // Predicated region
    $region18: #{tpu_custom_call.1} parent=1 // pred_check
      _
    $region19: #{tpu_custom_call.1} parent=1 // pred_check_branch
      %22 = sbr.rel (0) target = $region21
    $region20: #{tpu_custom_call.1} parent=1 // pred_region
      _
    $region21: #{tpu_custom_call.1} parent=1 // pred_fallthru
      _
    // Predicated region
    $region22: #{tpu_custom_call.1} parent=1 // pred_check
      _
    $region23: #{tpu_custom_call.1} parent=1 // pred_check_branch
      %24 = sbr.rel (0) target = $region25
    $region24: #{tpu_custom_call.1} parent=1 // pred_region
      _
    $region25: #{tpu_custom_call.1} parent=1 // pred_fallthru
      _
    // Predicated region
    $region26: #{tpu_custom_call.1} parent=1 // pred_check
      _
    $region27: #{tpu_custom_call.1} parent=1 // pred_check_branch
      %26 = sbr.rel (0) target = $region29
    $region28: #{tpu_custom_call.1} parent=1 // pred_region
      _
    $region29: #{tpu_custom_call.1} parent=1 // pred_fallthru
      _
    %v27 = vld [vmem:[%s0] sm:$0x3]
    %v28 = vld [vmem:[%s1] sm:$0xff]
    %v29 = vld [vmem:[%s1 + $0x8] sm:$0xff]
    %v30 = vld [vmem:[%s1 + $0x10] sm:$0xff]
    %v31 = vld [vmem:[%s1 + $0x18] sm:$0xff]
    %v32 = vld [vmem:[%s1 + $0x20] sm:$0xff]
    %v33 = vld [vmem:[%s1 + $0x28] sm:$0xff]
    %v34 = vld [vmem:[%s1 + $0x30] sm:$0xff]
    %v35 = vld [vmem:[%s1 + $0x38] sm:$0xff]
    %v36 = vld [vmem:[%s1 + $0x40] sm:$0xff]
    %v37 = vld [vmem:[%s1 + $0x48] sm:$0xff]
    %v38 = vld [vmem:[%s1 + $0x50] sm:$0xff]
    %v39 = vld [vmem:[%s1 + $0x58] sm:$0xff]
    %v40 = vld [vmem:[%s1 + $0x60] sm:$0xff]
    %v41 = vld [vmem:[%s1 + $0x68] sm:$0xff]
    %v42 = vld [vmem:[%s1 + $0x70] sm:$0xff]
    %v43 = vld [vmem:[%s1 + $0x78] sm:$0xff]
    %v44 = vld [vmem:[%s2] sm:$0x1]
    %v46 = vperm.slane %v44, 0
    %48 = vmatpush.msra.mxu0 %v43
    %49 = vmatpush.msra.mxu0 %v42
    %50 = vmatpush.msra.mxu0 %v41
    %51 = vmatpush.msra.mxu0 %v40
    %52 = vmatpush.msra.mxu0 %v39
    %53 = vmatpush.msra.mxu0 %v38
    %54 = vmatpush.msra.mxu0 %v37
    %55 = vmatpush.msra.mxu0 %v36
    %56 = vmatpush.msra.mxu0 %v35
    %57 = vmatpush.msra.mxu0 %v34
    %58 = vmatpush.msra.mxu0 %v33
    %59 = vmatpush.msra.mxu0 %v32
    %60 = vmatpush.msra.mxu0 %v31
    %61 = vmatpush.msra.mxu0 %v30
    %62 = vmatpush.msra.mxu0 %v29
    %63 = vmatpush.msra.mxu0 %v28
    %64 = vmatmul.f32.gmra.mxu0 %v27
    %v65 = vpop.f32.mrf.mxu0
    %v66 = vadd.f32 %v46, %v65
    %67 = vdwg.mxu0
    %v68 = vmax.f32 %v66, 0.0
    %v69 = vld [vmem:[%s3] sm:$0xff]
    %v70 = vld [vmem:[%s3 + $0x8] sm:$0xff]
    %v71 = vld [vmem:[%s3 + $0x10] sm:$0xff]
    %v72 = vld [vmem:[%s3 + $0x18] sm:$0xff]
    %v73 = vld [vmem:[%s3 + $0x20] sm:$0xff]
    %v74 = vld [vmem:[%s3 + $0x28] sm:$0xff]
    %v75 = vld [vmem:[%s4] sm:$0x1]
    %v77 = vperm.slane %v75, 0
    %vm79 = vcmask 392192
    %v81 = vsel %vm79, %v68, 0
    %83 = vmatpush.msra.mxu0 0.0
    %84 = vmatpush.msra.mxu0 0.0
    %85 = vmatpush.msra.mxu0 0.0
    %86 = vmatpush.msra.mxu0 0.0
    %87 = vmatpush.msra.mxu0 0.0
    %88 = vmatpush.msra.mxu0 0.0
    %89 = vmatpush.msra.mxu0 0.0
    %90 = vmatpush.msra.mxu0 0.0
    %91 = vmatpush.msra.mxu0 0.0
    %92 = vmatpush.msra.mxu0 0.0
    %93 = vmatpush.msra.mxu0 %v74
    %94 = vmatpush.msra.mxu0 %v73
    %95 = vmatpush.msra.mxu0 %v72
    %96 = vmatpush.msra.mxu0 %v71
    %97 = vmatpush.msra.mxu0 %v70
    %98 = vmatpush.msra.mxu0 %v69
    %99 = vmatmul.f32.gmra.mxu0 %v81
    %v100 = vpop.f32.mrf.mxu0
    %v101 = vadd.f32 %v77, %v100
    %102 = vdwg.mxu0
    %v103 = vmax.f32 %v101, 0.0
    %v104 = vld [vmem:[%s5] sm:$0xff]
    %v105 = vld [vmem:[%s5 + $0x8] sm:$0xff]
    %v106 = vld [vmem:[%s6] sm:$0x1]
    %v108 = vperm.slane %v106, 0
    %vm110 = vcmask 130048
    %v112 = vsel %vm110, %v103, 0
    %114 = vmatpush.msra.mxu0 0.0
    %115 = vmatpush.msra.mxu0 0.0
    %116 = vmatpush.msra.mxu0 0.0
    %117 = vmatpush.msra.mxu0 0.0
    %118 = vmatpush.msra.mxu0 0.0
    %119 = vmatpush.msra.mxu0 0.0
    %120 = vmatpush.msra.mxu0 0.0
    %121 = vmatpush.msra.mxu0 0.0
    %122 = vmatpush.msra.mxu0 0.0
    %123 = vmatpush.msra.mxu0 0.0
    %124 = vmatpush.msra.mxu0 0.0
    %125 = vmatpush.msra.mxu0 0.0
    %126 = vmatpush.msra.mxu0 0.0
    %127 = vmatpush.msra.mxu0 0.0
    %128 = vmatpush.msra.mxu0 %v105
    %129 = vmatpush.msra.mxu0 %v104
    %130 = vmatmul.f32.gmra.mxu0 %v112
    %v131 = vpop.f32.mrf.mxu0
    %v132 = vadd.f32 %v108, %v131
    %133 = vdwg.mxu0
    %vm134 = vcmask 123904
    %135 = vst.msk [vmem:[#allocation2] sm:$0x3] %vm134, %v132
    // Predicated region
    $region30: #{tpu_custom_call.1} parent=1 // pred_check
      _
    $region31: #{tpu_custom_call.1} parent=1 // pred_check_branch
      %137 = sbr.rel (0) target = $region33
    $region32: #{tpu_custom_call.1} parent=1 // pred_region
      %139 = vsyncadd [#allocation3], 0
      %s141 = sshll.u32 [#allocation2], 4
      %s142 = int_to_ptr.vmem [resolvable:$true] %s141
      %s143 = sshll.u32 %s7, 4
      %s144 = int_to_ptr.hbm [resolvable:$true] %s143
      %146 = dma.vmem_to_hbm [thread:$0]  %s142, 32, %s144, [#allocation3]
    $region33: #{tpu_custom_call.1} parent=1 // pred_fallthru
      _
    // Predicated region
    $region34: #{tpu_custom_call.1} parent=1 // pred_check
      _
    $region35: #{tpu_custom_call.1} parent=1 // pred_check_branch
      %148 = sbr.rel (0) target = $region37
    $region36: #{tpu_custom_call.1} parent=1 // pred_region
      %150 = dma.done [#allocation3], 32
    $region37: #{tpu_custom_call.1} parent=1 // pred_fallthru
      _
    %151 = vsyncpa [#allocation3], 1

</llo_original>
